<compile_context>
chip_gen: v7x
topology: tpu7x:2x2x1
jax: 0.10.0
libtpu: 0.0.40
codegen_flags: <defaults>
</compile_context>

<pallas_src>
import functools

import jax
import jax.numpy as jnp
from jax.experimental import pallas as pl
from jax.experimental.pallas import tpu as pltpu


def _lrn_kernel(x_ref, o_ref, *, local_size, alpha, beta, pad):
    # x_ref / o_ref: (Nb, C, TILE_HW); channels on sublanes, spatial on lanes.
    x = x_ref[...]
    xf = x.astype(jnp.float32)          # cast BEFORE squaring (bf16/fp16 parity)
    sq = xf * xf
    C = sq.shape[1]

    # Cross-channel windowed sum: acc[c] = sum_k sq[c + k - pad], zero outside
    # [0, C) (matches AvgPool3d's zero padding, count_include_pad=True).
    acc = sq
    for k in range(local_size):
        off = k - pad
        if off == 0 or abs(off) >= C:
            continue
        if off > 0:
            shifted = jnp.pad(sq[:, off:, :], ((0, 0), (0, off), (0, 0)))
        else:
            shifted = jnp.pad(sq[:, : C + off, :], ((0, 0), (-off, 0), (0, 0)))
        acc = acc + shifted

    base = acc * (alpha / float(local_size)) + 1.0
    # out = x / base**beta  ==  x * base**(-beta): one EUP pow, no divide.
    o_ref[...] = (xf * jnp.power(base, -beta)).astype(o_ref.dtype)


def _largest_divisor_leq(n, cap):
    cap = max(1, min(int(n), int(cap)))
    for d in range(cap, 0, -1):
        if n % d == 0:
            return d
    return 1


def _vmem_limit_bytes():
    """Generation-aware scoped-VMEM limit for this kernel."""
    try:
        cap = pltpu.get_tpu_info().vmem_capacity_bytes
    except Exception:
        cap = 64 * 1024 * 1024  # conservative: v7x per-TensorCore physical VMEM
    # Keep ~25% headroom for Mosaic-internal scratch; cap at 96 MiB (v5e/v6e).
    return min(int(cap * 3 // 4), 96 * 1024 * 1024)


def lrn_across_channels(x, local_size=1, alpha=1.0, beta=0.75):
    """x: (N, C, H, W) -> (N, C, H, W), ACROSS_CHANNELS=True LRN."""
    N, C, H, W = x.shape
    HW = H * W
    pad = int((local_size - 1.0) / 2)
    itemsize = jnp.dtype(x.dtype).itemsize
    x3 = x.reshape(N, C, HW)

    vmem_limit = _vmem_limit_bytes()
    # Per-element VMEM accounting: double-buffered in + out blocks in the native
    # dtype plus ~4 block-sized f32 temporaries (x_f32, sq, acc/shifted, pow).
    per_elem = 4 * itemsize + 4 * 4
    block_budget = int(vmem_limit * 0.85)
    # Target >= ~8 grid steps on large tensors (pipelining, v7x 2-TC sharding),
    # but never shrink a block below ~2 MiB of accounted footprint (roofline).
    total_bytes = N * C * HW * per_elem
    step_budget = min(block_budget, max(total_bytes // 8, 2 * 1024 * 1024))

    per_sample_plane = C * HW * per_elem
    if per_sample_plane <= step_budget:
        # Whole H*W plane per sample fits: last block dim == full HW, which is
        # exempt from the 128-lane rule -> no padding, no post-slice.
        tile_hw = HW
        grid_hw = 1
        nb = _largest_divisor_leq(N, step_budget // per_sample_plane)
    else:
        # Tile the spatial axis with lane-dense blocks; a partial last block is
        # handled by Pallas' masked writeback (cdiv grid), so no wrapper pad.
        nb = 1
        tile_hw = max(128, (step_budget // (C * per_elem)) // 128 * 128)
        grid_hw = pl.cdiv(HW, tile_hw)

    grid = (N // nb, grid_hw)

    kernel = functools.partial(
        _lrn_kernel, local_size=local_size, alpha=alpha, beta=beta, pad=pad
    )

    # Memory-bound custom call: tell XLA what the real DMA'd traffic is.
    cost = pl.CostEstimate(
        flops=(local_size + 5) * N * C * HW,
        transcendentals=2 * N * C * HW,
        bytes_accessed=2 * N * C * grid_hw * tile_hw * itemsize,
    )

    out = pl.pallas_call(
        kernel,
        out_shape=jax.ShapeDtypeStruct((N, C, HW), x.dtype),
        grid_spec=pltpu.PrefetchScalarGridSpec(
            num_scalar_prefetch=0,
            grid=grid,
            in_specs=[pl.BlockSpec((nb, C, tile_hw), lambda n, t: (n, 0, t))],
            out_specs=pl.BlockSpec((nb, C, tile_hw), lambda n, t: (n, 0, t)),
        ),
        compiler_params=pltpu.CompilerParams(
            dimension_semantics=("parallel", "parallel"),
            vmem_limit_bytes=vmem_limit,
        ),
        cost_estimate=cost,
    )(x3)

    return out.reshape(N, C, H, W)


def _lrn_reference(x, local_size=1, alpha=1.0, beta=0.75):
    """Pure-JAX reference mirroring the PyTorch forward (across channels)."""
    pad = int((local_size - 1.0) / 2)
    xf = x.astype(jnp.float32)
    sq = xf * xf
    C = x.shape[1]
    sq_p = jnp.pad(sq, ((0, 0), (pad, local_size - 1 - pad), (0, 0), (0, 0)))
    acc = sum(sq_p[:, k : k + C] for k in range(local_size))
    div = (acc / local_size * alpha + 1.0) ** beta
    return (xf / div).astype(x.dtype)


if __name__ == "__main__":
    key = jax.random.PRNGKey(0)
    x = jax.random.normal(key, (2, 4, 16, 16), dtype=jnp.float32)

    # Default module config: local_size=1, alpha=1.0, beta=0.75.
    out = jax.block_until_ready(lrn_across_channels(x, 1, 1.0, 0.75))
    ref = _lrn_reference(x, 1, 1.0, 0.75)
    assert jnp.allclose(out, ref, atol=1e-5, rtol=1e-5)

    # Non-trivial cross-channel window.
    out2 = jax.block_until_ready(lrn_across_channels(x, 3, 2.0, 0.75))
    ref2 = _lrn_reference(x, 3, 2.0, 0.75)
    assert jnp.allclose(out2, ref2, atol=1e-5, rtol=1e-5)

    # H*W not a multiple of 128 (7x7 feature map) -> full-extent last dim, no pad.
    x7 = jax.random.normal(jax.random.PRNGKey(1), (2, 4, 7, 7), dtype=jnp.float32)
    out3 = jax.block_until_ready(lrn_across_channels(x7, 3, 1.5, 0.75))
    ref3 = _lrn_reference(x7, 3, 1.5, 0.75)
    assert jnp.allclose(out3, ref3, atol=1e-5, rtol=1e-5)

    # Wider window on more channels (exercises both shift directions).
    x8 = jax.random.normal(jax.random.PRNGKey(2), (2, 8, 14, 14), dtype=jnp.float32)
    out4 = jax.block_until_ready(lrn_across_channels(x8, 5, 0.5, 0.75))
    ref4 = _lrn_reference(x8, 5, 0.5, 0.75)
    assert jnp.allclose(out4, ref4, atol=1e-5, rtol=1e-5)

    # bf16 input: kernel squares in f32 (matches the reference's cast-first order).
    xb = x.astype(jnp.bfloat16)
    out5 = jax.block_until_ready(lrn_across_channels(xb, 3, 2.0, 0.75))
    ref5 = _lrn_reference(xb, 3, 2.0, 0.75)
    assert jnp.allclose(
        out5.astype(jnp.float32), ref5.astype(jnp.float32), atol=2e-2, rtol=2e-2
    )

    print("KERNEL_OK")
</pallas_src>

<mosaic_0001>
module attributes {stable_mosaic.version = 11 : i64} {
  func.func @_lrn_kernel(%arg0: i32, %arg1: i32, %arg2: memref<2x4x256xf32, #tpu.memory_space<vmem>>, %arg3: memref<2x4x256xf32, #tpu.memory_space<vmem>>) attributes {dimension_semantics = [#tpu.dimension_semantics<parallel>, #tpu.dimension_semantics<parallel>], iteration_bounds = array<i64: 1, 1>, scalar_prefetch = 0 : i64, scratch_operands = 0 : i64, tpu.core_type = #tpu.core_type<tc>, window_params = [{transform_indices = @transform_0, window_bounds = array<i64: 2, 4, 256>}, {transform_indices = @transform_1, window_bounds = array<i64: 2, 4, 256>}]} {
    %c0 = arith.constant 0 : index
    %c0_0 = arith.constant 0 : index
    %c0_1 = arith.constant 0 : index
    %0 = vector.load %arg2[%c0, %c0_0, %c0_1] : memref<2x4x256xf32, #tpu.memory_space<vmem>>, vector<2x4x256xf32>
    %1 = arith.mulf %0, %0 : vector<2x4x256xf32>
    %cst = arith.constant 1.000000e+00 : f32
    %2 = vector.broadcast %cst : f32 to vector<2x4x256xf32>
    %3 = arith.mulf %1, %2 : vector<2x4x256xf32>
    %cst_2 = arith.constant 1.000000e+00 : f32
    %4 = vector.broadcast %cst_2 : f32 to vector<2x4x256xf32>
    %5 = arith.addf %3, %4 : vector<2x4x256xf32>
    %cst_3 = arith.constant -7.500000e-01 : f32
    %6 = vector.broadcast %cst_3 : f32 to vector<2x4x256xf32>
    %7 = math.powf %5, %6 : vector<2x4x256xf32>
    %8 = arith.mulf %0, %7 : vector<2x4x256xf32>
    %c0_4 = arith.constant 0 : index
    %c0_5 = arith.constant 0 : index
    %c0_6 = arith.constant 0 : index
    %9 = vector.load %arg3[%c0_4, %c0_5, %c0_6] : memref<2x4x256xf32, #tpu.memory_space<vmem>>, vector<2x4x256xf32>
    tpu.vector_store %arg3[%c0_4, %c0_5, %c0_6], %8 {strides = array<i32>} : memref<2x4x256xf32, #tpu.memory_space<vmem>>, vector<2x4x256xf32>,
    return
  }
  func.func @transform_0(%arg0: i32, %arg1: i32) -> (i32, i32, i32) {
    %c0_i32 = arith.constant 0 : i32
    %c0_i32_0 = arith.constant 0 : i32
    return %arg0, %c0_i32, %arg1 : i32, i32, i32
  }
  func.func @transform_1(%arg0: i32, %arg1: i32) -> (i32, i32, i32) {
    %c0_i32 = arith.constant 0 : i32
    %c0_i32_0 = arith.constant 0 : i32
    return %arg0, %c0_i32, %arg1 : i32, i32, i32
  }
}

</mosaic_0001>

<llo_original>
// kernel: tpu_custom_call.1
$region0: #{tpu_custom_call.1}
  #allocation0 [shape = 'u32[]', space=smem, size = 0x4, offset = 0x4, fixed_abs, tag = 'smem constant byte address 0x4 - core index']
  #allocation1 [shape = 'u32[144,128]{1,0:T(1,128)}', space=vmem, size = 0x12000, scoped, tag = 'internal scratch']
  %s0 = inlined_call_operand.hbm [shape: f32[2,4,256], index: 0, kind: input, shape index: {}]
  %s1 = inlined_call_operand.hbm [shape: f32[2,4,256], index: 1, kind: output, shape index: {}]
  %s2 = sld [smem:[#allocation0]]
  $region18: #{tpu_custom_call.1} parent=0
    _
  %s4 = ssub.s32 1, %s2
  %s5 = scalar_select 0, %s4, %s2
  $region1: #{tpu_custom_call.1} parent=0
    #allocation2 [shape = 'u8[8192]{0}', space=vmem, size = 0x2000, scoped, tag = 'input window, operand 0, single buffered']
    #allocation3 [shape = 's32[1]{0}', space=sflag, size = 0x4, scoped, tag = 'scoped memory for tpu_custom_call.1']
    #allocation4 [shape = 's32[1]{0}', space=sflag, size = 0x4, scoped, tag = 'scoped memory for tpu_custom_call.1']
    #allocation5 [shape = 'u8[8192]{0}', space=vmem, size = 0x2000, scoped, tag = 'output window, operand 0, single buffered']
    %6 = vsyncpa [#allocation3], 0
    %7 = vsyncpa [#allocation4], 0
    // Predicated region
    $region2: #{tpu_custom_call.1} parent=1 // pred_check
      _
    $region3: #{tpu_custom_call.1} parent=1 // pred_check_branch
      %9 = sbr.rel (0) target = $region5
    $region4: #{tpu_custom_call.1} parent=1 // pred_region
      %s11 = ssub.s32 256, 256
      %12 = vsyncadd [#allocation3], %s11
      %s13 = sshll.u32 [#allocation2], 4
      %s14 = int_to_ptr.vmem [resolvable:$true] %s13
      %19 = dma.hbm_to_vmem [thread:$0]  %s0, 256, %s14, [#allocation3], 128, 128, 8
    $region5: #{tpu_custom_call.1} parent=1 // pred_fallthru
      _
    // Predicated region
    $region6: #{tpu_custom_call.1} parent=1 // pred_check
      _
    $region7: #{tpu_custom_call.1} parent=1 // pred_check_branch
      %21 = sbr.rel (0) target = $region9
    $region8: #{tpu_custom_call.1} parent=1 // pred_region
      %22 = dma.done [#allocation3], 256
    $region9: #{tpu_custom_call.1} parent=1 // pred_fallthru
      _
    %v23 = vld [vmem:[#allocation2] sm:$0xff]
    %v24 = vld [vmem:[#allocation2 + $0x8] sm:$0xff]
    %v25 = vmul.f32 %v23, %v23
    %v26 = vmul.f32 %v24, %v24
    %v27 = vadd.f32 %v25, 1.0
    %v28 = vadd.f32 %v26, 1.0
    %v29 = vpow.f32 %v27, -0.75
    %v30 = vpow.f32 %v28, -0.75
    %v31 = vmul.f32 %v23, %v29
    %v32 = vmul.f32 %v24, %v30
    %33 = vst [vmem:[#allocation5] sm:$0xff] %v31
    %34 = vst [vmem:[#allocation5 + $0x8] sm:$0xff] %v32
    // Predicated region
    $region10: #{tpu_custom_call.1} parent=1 // pred_check
      _
    $region11: #{tpu_custom_call.1} parent=1 // pred_check_branch
      %36 = sbr.rel (0) target = $region13
    $region12: #{tpu_custom_call.1} parent=1 // pred_region
      %s38 = ssub.s32 256, 256
      %39 = vsyncadd [#allocation4], %s38
      %s40 = sshll.u32 [#allocation5], 4
      %s41 = int_to_ptr.vmem [resolvable:$true] %s40
      %46 = dma.vmem_to_hbm [thread:$0]  %s41, 256, %s1, [#allocation4], 128, 128, 8
    $region13: #{tpu_custom_call.1} parent=1 // pred_fallthru
      _
    // Predicated region
    $region14: #{tpu_custom_call.1} parent=1 // pred_check
      _
    $region15: #{tpu_custom_call.1} parent=1 // pred_check_branch
      %48 = sbr.rel (0) target = $region17
    $region16: #{tpu_custom_call.1} parent=1 // pred_region
      %49 = dma.done [#allocation4], 256
    $region17: #{tpu_custom_call.1} parent=1 // pred_fallthru
      _
    %50 = vsyncpa [#allocation3], 1
    %51 = vsyncpa [#allocation4], 1

</llo_original>
